<compile_context>
chip_gen: v7x
topology: tpu7x:2x2x1
jax: 0.10.0
libtpu: 0.0.40
codegen_flags: <defaults>
</compile_context>

<pallas_src>
import functools

import jax
import jax.numpy as jnp
from jax.experimental import pallas as pl
from jax.experimental.pallas import tpu as pltpu

LANE = 128      # TPU lane width
TILE_M = 256    # output-row tile (multiple of 256 for v6e/v7x MXU geometry)
TILE_K = 256    # contraction tile over A_hat columns (multiple of 128)


def _round_up(x, m):
    return ((x + m - 1) // m) * m


def _pad2d(a, rows, cols):
    return jnp.pad(a, ((0, rows - a.shape[0]), (0, cols - a.shape[1])))


# --------------------------------------------------------------------------
# Kernel 1: feature transform  Z = X @ W   (tiny: N x F @ F x H_pad)
# --------------------------------------------------------------------------
def _feature_transform_kernel(x_ref, w_ref, o_ref):
    o_ref[...] = jnp.dot(
        x_ref[...], w_ref[...], preferred_element_type=jnp.float32
    ).astype(o_ref.dtype)


def _feature_transform(x, w, *, tile_m=TILE_M):
    n_pad, f = x.shape
    h_pad = w.shape[1]
    return pl.pallas_call(
        _feature_transform_kernel,
        out_shape=jax.ShapeDtypeStruct((n_pad, h_pad), jnp.bfloat16),
        grid=(n_pad // tile_m,),
        in_specs=[
            pl.BlockSpec((tile_m, f), lambda i: (i, 0)),
            pl.BlockSpec((f, h_pad), lambda i: (0, 0)),
        ],
        out_specs=pl.BlockSpec((tile_m, h_pad), lambda i: (i, 0)),
        compiler_params=pltpu.CompilerParams(dimension_semantics=("parallel",)),
    )(x, w)


# --------------------------------------------------------------------------
# Kernel 2: tiled aggregation  O = A_hat @ Z + b  (optionally fused ReLU)
#   grid = (row blocks [parallel], K blocks [arbitrary, reduction last])
# --------------------------------------------------------------------------
def _aggregate_kernel(a_ref, z_ref, b_ref, o_ref, acc_ref, *, apply_relu):
    k = pl.program_id(1)

    @pl.when(k == 0)
    def _init():
        acc_ref[...] = jnp.zeros_like(acc_ref)

    acc_ref[...] += jnp.dot(
        a_ref[...], z_ref[...], preferred_element_type=jnp.float32
    )

    @pl.when(k == pl.num_programs(1) - 1)
    def _finalize():
        r = acc_ref[...] + b_ref[...]
        if apply_relu:
            r = jnp.maximum(r, 0.0)
        o_ref[...] = r.astype(o_ref.dtype)


def _aggregate(a, z, b, *, apply_relu, out_dtype, tile_m=TILE_M, tile_k=TILE_K):
    n_pad = a.shape[0]
    h_pad = z.shape[1]
    out_itemsize = jnp.dtype(out_dtype).itemsize
    bytes_accessed = int(
        a.size * a.dtype.itemsize
        + z.size * z.dtype.itemsize
        + b.size * b.dtype.itemsize
        + n_pad * h_pad * out_itemsize
    )
    return pl.pallas_call(
        functools.partial(_aggregate_kernel, apply_relu=apply_relu),
        out_shape=jax.ShapeDtypeStruct((n_pad, h_pad), out_dtype),
        grid=(n_pad // tile_m, n_pad // tile_k),
        in_specs=[
            pl.BlockSpec((tile_m, tile_k), lambda i, k: (i, k)),   # A_hat tile
            pl.BlockSpec((tile_k, h_pad), lambda i, k: (k, 0)),    # Z tile
            pl.BlockSpec((1, h_pad), lambda i, k: (0, 0)),         # bias row
        ],
        out_specs=pl.BlockSpec((tile_m, h_pad), lambda i, k: (i, 0)),
        scratch_shapes=[pltpu.VMEM((tile_m, h_pad), jnp.float32)],
        compiler_params=pltpu.CompilerParams(
            dimension_semantics=("parallel", "arbitrary")
        ),
        cost_estimate=pl.CostEstimate(
            flops=int(2 * n_pad * n_pad * h_pad),
            transcendentals=0,
            bytes_accessed=bytes_accessed,
        ),
    )(a, z, b)


# --------------------------------------------------------------------------
# Wrapper: full GCNRegressor forward
# --------------------------------------------------------------------------
def gcn_regressor(a_hat, x, w1, b1, w2, b2):
    """y = squeeze( A_hat @ (relu(A_hat @ (x @ W1) + b1) @ W2) + b2 )."""
    n, in_ch = x.shape
    hid = w1.shape[1]

    n_pad = _round_up(n, TILE_M)
    h_pad = _round_up(hid, LANE)
    o_pad = LANE  # lane-dense slab for the scalar output column

    f32, bf16 = jnp.float32, jnp.bfloat16

    # Zero-pad and quantize matmul operands to bf16 (MXU accumulates in f32).
    a_p = _pad2d(a_hat.astype(bf16), n_pad, n_pad)
    x_p = _pad2d(x.astype(bf16), n_pad, in_ch)
    w1_p = _pad2d(w1.astype(bf16), in_ch, h_pad)
    w2_p = jnp.zeros((h_pad, o_pad), bf16).at[:hid, 0].set(w2[:, 0].astype(bf16))
    b1_p = jnp.zeros((1, h_pad), f32).at[0, :hid].set(b1.astype(f32))
    b2_p = jnp.zeros((1, o_pad), f32).at[0, 0].set(b2.reshape(()).astype(f32))

    # Layer 1: h = relu(A_hat @ (x @ W1) + b1)
    z1 = _feature_transform(x_p, w1_p)
    h = _aggregate(a_p, z1, b1_p, apply_relu=True, out_dtype=bf16)

    # Layer 2: y = A_hat @ (h @ W2) + b2
    z2 = _feature_transform(h, w2_p)
    y = _aggregate(a_p, z2, b2_p, apply_relu=False, out_dtype=f32)

    # matches torch `.squeeze()` of an (N, 1) result -> (N,)
    return y[:n, 0]


# --------------------------------------------------------------------------
# Plain-JAX glue: dense GCNConv-style normalized adjacency.
# --------------------------------------------------------------------------
def build_normalized_adjacency(edge_index, num_nodes):
    """A_hat = D^{-1/2} (A + I) D^{-1/2}, returned in bf16 (streamed operand)."""
    src, dst = edge_index[0], edge_index[1]
    adj = jnp.zeros((num_nodes, num_nodes), jnp.float32)
    adj = adj.at[src, dst].set(1.0)
    adj = adj.at[dst, src].set(1.0)                                   # undirected
    adj = jnp.maximum(adj, jnp.eye(num_nodes, dtype=jnp.float32))     # self-loops (weight 1)
    deg = jnp.sum(adj, axis=1)
    d_inv_sqrt = jnp.where(deg > 0, jax.lax.rsqrt(deg), 0.0)
    a_hat = d_inv_sqrt[:, None] * adj * d_inv_sqrt[None, :]
    return a_hat.astype(jnp.bfloat16)


if __name__ == "__main__":
    key = jax.random.PRNGKey(0)
    k_x, k_e, k_w1, k_b1, k_w2, k_b2 = jax.random.split(key, 6)

    # Small synthetic shapes consistent with the module:
    # N nodes, in_channels=8 features per node, hidden_channels=32.
    N, IN_CH, HID = 16, 8, 32

    x = jax.random.normal(k_x, (N, IN_CH), dtype=jnp.float32)

    num_edges = 24
    edge_index = jax.random.randint(k_e, (2, num_edges), 0, N, dtype=jnp.int32)
    a_hat = build_normalized_adjacency(edge_index, N)

    # Deterministic parameter init (glorot-ish scale; synthetic, not a checkpoint).
    w1 = jax.random.normal(k_w1, (IN_CH, HID), dtype=jnp.float32) / jnp.sqrt(IN_CH)
    b1 = jax.random.normal(k_b1, (HID,), dtype=jnp.float32) * 0.01
    w2 = jax.random.normal(k_w2, (HID, 1), dtype=jnp.float32) / jnp.sqrt(HID)
    b2 = jax.random.normal(k_b2, (1,), dtype=jnp.float32) * 0.01

    out = jax.block_until_ready(gcn_regressor(a_hat, x, w1, b1, w2, b2))

    # Pure-JAX reference mirroring the kernel numerics (bf16 operands, f32 accum).
    xb, w1b, w2b = (t.astype(jnp.bfloat16) for t in (x, w1, w2))
    z1 = jnp.dot(xb, w1b, preferred_element_type=jnp.float32).astype(jnp.bfloat16)
    h_ref = jnp.maximum(
        jnp.dot(a_hat, z1, preferred_element_type=jnp.float32) + b1[None, :], 0.0
    ).astype(jnp.bfloat16)
    z2 = jnp.dot(h_ref, w2b, preferred_element_type=jnp.float32).astype(jnp.bfloat16)
    y_ref = (
        jnp.dot(a_hat, z2, preferred_element_type=jnp.float32) + b2[None, :]
    ).squeeze(-1)

    assert out.shape == (N,), out.shape
    assert jnp.allclose(out, y_ref, atol=2e-3, rtol=2e-3), float(
        jnp.max(jnp.abs(out - y_ref))
    )

    print("KERNEL_OK")
</pallas_src>

<mosaic_0001>
module attributes {stable_mosaic.version = 11 : i64} {
  func.func @_feature_transform_kernel(%arg0: i32, %arg1: memref<256x8xbf16, #tpu.memory_space<vmem>>, %arg2: memref<8x128xbf16, #tpu.memory_space<vmem>>, %arg3: memref<256x128xbf16, #tpu.memory_space<vmem>>) attributes {dimension_semantics = [#tpu.dimension_semantics<parallel>], iteration_bounds = array<i64: 1>, scalar_prefetch = 0 : i64, scratch_operands = 0 : i64, tpu.core_type = #tpu.core_type<tc>, window_params = [{transform_indices = @transform_0, window_bounds = array<i64: 256, 8>}, {pipeline_mode = #tpu.pipeline_mode<synchronous>, transform_indices = @transform_1, window_bounds = array<i64: 8, 128>}, {transform_indices = @transform_2, window_bounds = array<i64: 256, 128>}]} {
    %c0 = arith.constant 0 : index
    %c0_0 = arith.constant 0 : index
    %0 = vector.load %arg1[%c0, %c0_0] : memref<256x8xbf16, #tpu.memory_space<vmem>>, vector<256x8xbf16>
    %c0_1 = arith.constant 0 : index
    %c0_2 = arith.constant 0 : index
    %1 = vector.load %arg2[%c0_1, %c0_2] : memref<8x128xbf16, #tpu.memory_space<vmem>>, vector<8x128xbf16>
    %cst = arith.constant dense<0.000000e+00> : vector<256x128xf32>
    %2 = tpu.matmul %0, %1, %cst {dimension_numbers = #tpu.dot_dimension_numbers<[1], [0], [0], [1], [0, 0, 1, 1], [], []>} : vector<256x8xbf16>, vector<8x128xbf16>, vector<256x128xf32> -> vector<256x128xf32>
    %3 = arith.truncf %2 : vector<256x128xf32> to vector<256x128xbf16>
    %c0_3 = arith.constant 0 : index
    %c0_4 = arith.constant 0 : index
    %4 = vector.load %arg3[%c0_3, %c0_4] : memref<256x128xbf16, #tpu.memory_space<vmem>>, vector<256x128xbf16>
    tpu.vector_store %arg3[%c0_3, %c0_4], %3 {strides = array<i32>} : memref<256x128xbf16, #tpu.memory_space<vmem>>, vector<256x128xbf16>,
    return
  }
  func.func @transform_0(%arg0: i32) -> (i32, i32) {
    %c0_i32 = arith.constant 0 : i32
    %c0_i32_0 = arith.constant 0 : i32
    return %arg0, %c0_i32 : i32, i32
  }
  func.func @transform_1(%arg0: i32) -> (i32, i32) {
    %c0_i32 = arith.constant 0 : i32
    %c0_i32_0 = arith.constant 0 : i32
    %c0_i32_1 = arith.constant 0 : i32
    return %c0_i32, %c0_i32_0 : i32, i32
  }
  func.func @transform_2(%arg0: i32) -> (i32, i32) {
    %c0_i32 = arith.constant 0 : i32
    %c0_i32_0 = arith.constant 0 : i32
    return %arg0, %c0_i32 : i32, i32
  }
}

</mosaic_0001>

<llo_original>
// kernel: tpu_custom_call.1
$region0: #{tpu_custom_call.1}
  #allocation0 [shape = 'u32[]', space=smem, size = 0x4, offset = 0x4, fixed_abs, tag = 'smem constant byte address 0x4 - core index']
  #allocation1 [shape = 'u32[144,128]{1,0:T(1,128)}', space=vmem, size = 0x12000, scoped, tag = 'internal scratch']
  %s0 = inlined_call_operand.vmem [shape: bf16[256,8], index: 0, kind: input, shape index: {}]
  %s1 = inlined_call_operand.vmem [shape: bf16[8,128], index: 1, kind: input, shape index: {}]
  %s2 = inlined_call_operand.hbm [shape: bf16[256,128], index: 2, kind: output, shape index: {}]
  %s3 = sld [smem:[#allocation0]]
  $region18: #{tpu_custom_call.1} parent=0
    _
  %s5 = ssub.s32 1, %s3
  %s6 = scalar_select 0, %s5, %s3
  $region1: #{tpu_custom_call.1} parent=0
    #allocation2 [shape = 'u8[65536]{0}', space=vmem, size = 0x10000, scoped, tag = 'output window, operand 0, single buffered']
    #allocation3 [shape = 's32[1]{0}', space=sflag, size = 0x4, scoped, tag = 'scoped memory for tpu_custom_call.1']
    %7 = vsyncpa [#allocation3], 0
    // Predicated region
    $region2: #{tpu_custom_call.1} parent=1 // pred_check
      _
    $region3: #{tpu_custom_call.1} parent=1 // pred_check_branch
      %9 = sbr.rel (0) target = $region5
    $region4: #{tpu_custom_call.1} parent=1 // pred_region
      _
    $region5: #{tpu_custom_call.1} parent=1 // pred_fallthru
      _
    // Predicated region
    $region6: #{tpu_custom_call.1} parent=1 // pred_check
      _
    $region7: #{tpu_custom_call.1} parent=1 // pred_check_branch
      %11 = sbr.rel (0) target = $region9
    $region8: #{tpu_custom_call.1} parent=1 // pred_region
      _
    $region9: #{tpu_custom_call.1} parent=1 // pred_fallthru
      _
    %v13 = vld [vmem:[%s0] sm:$0xf]
    %v14 = vld [vmem:[%s0 + $0x4] sm:$0xf]
    %v15 = vld [vmem:[%s0 + $0x8] sm:$0xf]
    %v16 = vld [vmem:[%s0 + $0xc] sm:$0xf]
    %v17 = vld [vmem:[%s0 + $0x10] sm:$0xf]
    %v18 = vld [vmem:[%s0 + $0x14] sm:$0xf]
    %v19 = vld [vmem:[%s0 + $0x18] sm:$0xf]
    %v20 = vld [vmem:[%s0 + $0x1c] sm:$0xf]
    %v21 = vld [vmem:[%s0 + $0x20] sm:$0xf]
    %v22 = vld [vmem:[%s0 + $0x24] sm:$0xf]
    %v23 = vld [vmem:[%s0 + $0x28] sm:$0xf]
    %v24 = vld [vmem:[%s0 + $0x2c] sm:$0xf]
    %v25 = vld [vmem:[%s0 + $0x30] sm:$0xf]
    %v26 = vld [vmem:[%s0 + $0x34] sm:$0xf]
    %v27 = vld [vmem:[%s0 + $0x38] sm:$0xf]
    %v28 = vld [vmem:[%s0 + $0x3c] sm:$0xf]
    %v29 = vld [vmem:[%s0 + $0x40] sm:$0xf]
    %v30 = vld [vmem:[%s0 + $0x44] sm:$0xf]
    %v31 = vld [vmem:[%s0 + $0x48] sm:$0xf]
    %v32 = vld [vmem:[%s0 + $0x4c] sm:$0xf]
    %v33 = vld [vmem:[%s0 + $0x50] sm:$0xf]
    %v34 = vld [vmem:[%s0 + $0x54] sm:$0xf]
    %v35 = vld [vmem:[%s0 + $0x58] sm:$0xf]
    %v36 = vld [vmem:[%s0 + $0x5c] sm:$0xf]
    %v37 = vld [vmem:[%s0 + $0x60] sm:$0xf]
    %v38 = vld [vmem:[%s0 + $0x64] sm:$0xf]
    %v39 = vld [vmem:[%s0 + $0x68] sm:$0xf]
    %v40 = vld [vmem:[%s0 + $0x6c] sm:$0xf]
    %v41 = vld [vmem:[%s0 + $0x70] sm:$0xf]
    %v42 = vld [vmem:[%s0 + $0x74] sm:$0xf]
    %v43 = vld [vmem:[%s0 + $0x78] sm:$0xf]
    %v44 = vld [vmem:[%s0 + $0x7c] sm:$0xf]
    %v45 = vld [vmem:[%s1] sm:$0xf]
    %v78 = vunpack.c.l.b16 %v13
    %v79 = vunpack.c.l.b16 %v14
    %v80 = vunpack.c.l.b16 %v15
    %v81 = vunpack.c.l.b16 %v16
    %v82 = vunpack.c.l.b16 %v17
    %v83 = vunpack.c.l.b16 %v18
    %v84 = vunpack.c.l.b16 %v19
    %v85 = vunpack.c.l.b16 %v20
    %v86 = vunpack.c.l.b16 %v21
    %v87 = vunpack.c.l.b16 %v22
    %v88 = vunpack.c.l.b16 %v23
    %v89 = vunpack.c.l.b16 %v24
    %v90 = vunpack.c.l.b16 %v25
    %v91 = vunpack.c.l.b16 %v26
    %v92 = vunpack.c.l.b16 %v27
    %v93 = vunpack.c.l.b16 %v28
    %v94 = vunpack.c.l.b16 %v29
    %v95 = vunpack.c.l.b16 %v30
    %v96 = vunpack.c.l.b16 %v31
    %v97 = vunpack.c.l.b16 %v32
    %v98 = vunpack.c.l.b16 %v33
    %v99 = vunpack.c.l.b16 %v34
    %v100 = vunpack.c.l.b16 %v35
    %v101 = vunpack.c.l.b16 %v36
    %v102 = vunpack.c.l.b16 %v37
    %v103 = vunpack.c.l.b16 %v38
    %v104 = vunpack.c.l.b16 %v39
    %v105 = vunpack.c.l.b16 %v40
    %v106 = vunpack.c.l.b16 %v41
    %v107 = vunpack.c.l.b16 %v42
    %v108 = vunpack.c.l.b16 %v43
    %v109 = vunpack.c.l.b16 %v44
    %v110 = vpack.c.b16 %v79, %v78
    %v111 = vpack.c.b16 %v81, %v80
    %v112 = vpack.c.b16 %v83, %v82
    %v113 = vpack.c.b16 %v85, %v84
    %v114 = vpack.c.b16 %v87, %v86
    %v115 = vpack.c.b16 %v89, %v88
    %v116 = vpack.c.b16 %v91, %v90
    %v117 = vpack.c.b16 %v93, %v92
    %v118 = vpack.c.b16 %v95, %v94
    %v119 = vpack.c.b16 %v97, %v96
    %v120 = vpack.c.b16 %v99, %v98
    %v121 = vpack.c.b16 %v101, %v100
    %v122 = vpack.c.b16 %v103, %v102
    %v123 = vpack.c.b16 %v105, %v104
    %v124 = vpack.c.b16 %v107, %v106
    %v125 = vpack.c.b16 %v109, %v108
    %vm126 = vcmask 64512
    %v128 = vsel %vm126, %v110, 0
    %v131 = vsel %vm126, %v111, 0
    %v134 = vsel %vm126, %v112, 0
    %v137 = vsel %vm126, %v113, 0
    %v140 = vsel %vm126, %v114, 0
    %v143 = vsel %vm126, %v115, 0
    %v146 = vsel %vm126, %v116, 0
    %v149 = vsel %vm126, %v117, 0
    %v152 = vsel %vm126, %v118, 0
    %v155 = vsel %vm126, %v119, 0
    %v158 = vsel %vm126, %v120, 0
    %v161 = vsel %vm126, %v121, 0
    %v164 = vsel %vm126, %v122, 0
    %v167 = vsel %vm126, %v123, 0
    %v170 = vsel %vm126, %v124, 0
    %v173 = vsel %vm126, %v125, 0
    %vm175 = vcmask 1043456
    %v177 = vsel %vm175, %v45, 0
    %179 = vmatprep.subr.bf16.mxu0 0
    %180 = vmatpush1.bf16.msra.mxu0 %v177
    %181 = vmatprep.subr.bf16.mxu0 0
    %182 = vmatpush1.bf16.msra.mxu0 0
    %183 = vmatprep.subr.bf16.mxu0 0
    %184 = vmatpush1.bf16.msra.mxu0 0
    %185 = vmatprep.subr.bf16.mxu0 0
    %186 = vmatpush1.bf16.msra.mxu0 0
    %187 = vmatprep.subr.bf16.mxu0 0
    %188 = vmatpush1.bf16.msra.mxu0 0
    %189 = vmatprep.subr.bf16.mxu0 0
    %190 = vmatpush1.bf16.msra.mxu0 0
    %191 = vmatprep.subr.bf16.mxu0 0
    %192 = vmatpush1.bf16.msra.mxu0 0
    %193 = vmatprep.subr.bf16.mxu0 0
    %194 = vmatpush1.bf16.msra.mxu0 0
    %195 = vmatprep.subr.bf16.mxu0 0
    %196 = vmatpush1.bf16.msra.mxu0 0
    %197 = vmatprep.subr.bf16.mxu0 0
    %198 = vmatpush1.bf16.msra.mxu0 0
    %199 = vmatprep.subr.bf16.mxu0 0
    %200 = vmatpush1.bf16.msra.mxu0 0
    %201 = vmatprep.subr.bf16.mxu0 0
    %202 = vmatpush1.bf16.msra.mxu0 0
    %203 = vmatprep.subr.bf16.mxu0 0
    %204 = vmatpush1.bf16.msra.mxu0 0
    %205 = vmatprep.subr.bf16.mxu0 0
    %206 = vmatpush1.bf16.msra.mxu0 0
    %207 = vmatprep.subr.bf16.mxu0 0
    %208 = vmatpush1.bf16.msra.mxu0 0
    %209 = vmatprep.subr.bf16.mxu0 0
    %210 = vmatpush1.bf16.msra.mxu0 0
    %211 = vmatprep.mubr.bf16.mxu0 0
    %212 = vmatmul.mubr.bf16.gmra.mrb[0].mxu0 %v128
    %v213 = vpop.f32.mrb[0].mxu0
    %v214 = vadd.f32 0.0, %v213
    %v215 = vpop.f32.mrb[0].mxu0
    %v216 = vpop.f32.mrb[0].mxu0
    %v217 = vadd.f32 0.0, %v216
    %v218 = vpop.f32.mrb[0].mxu0
    %219 = vmatprep.mubr.bf16.mxu0 0
    %220 = vmatmul.mubr.bf16.gmra.mrb[0].mxu0 %v131
    %v221 = vpop.f32.mrb[0].mxu0
    %v222 = vadd.f32 0.0, %v221
    %v223 = vpop.f32.mrb[0].mxu0
    %v224 = vpop.f32.mrb[0].mxu0
    %v225 = vadd.f32 0.0, %v224
    %v226 = vpop.f32.mrb[0].mxu0
    %227 = vmatprep.mubr.bf16.mxu0 0
    %228 = vmatmul.mubr.bf16.gmra.mrb[0].mxu0 %v134
    %v229 = vpop.f32.mrb[0].mxu0
    %v230 = vadd.f32 0.0, %v229
    %v231 = vpop.f32.mrb[0].mxu0
    %v232 = vpop.f32.mrb[0].mxu0
    %v233 = vadd.f32 0.0, %v232
    %v234 = vpop.f32.mrb[0].mxu0
    %235 = vmatprep.mubr.bf16.mxu0 0
    %236 = vmatmul.mubr.bf16.gmra.mrb[0].mxu0 %v137
    %v237 = vpop.f32.mrb[0].mxu0
    %v238 = vadd.f32 0.0, %v237
    %v239 = vpop.f32.mrb[0].mxu0
    %v240 = vpop.f32.mrb[0].mxu0
    %v241 = vadd.f32 0.0, %v240
    %v242 = vpop.f32.mrb[0].mxu0
    %243 = vmatprep.mubr.bf16.mxu0 0
    %244 = vmatmul.mubr.bf16.gmra.mrb[0].mxu0 %v140
    %v245 = vpop.f32.mrb[0].mxu0
    %v246 = vadd.f32 0.0, %v245
    %v247 = vpop.f32.mrb[0].mxu0
    %v248 = vpop.f32.mrb[0].mxu0
    %v249 = vadd.f32 0.0, %v248
    %v250 = vpop.f32.mrb[0].mxu0
    %251 = vmatprep.mubr.bf16.mxu0 0
    %252 = vmatmul.mubr.bf16.gmra.mrb[0].mxu0 %v143
    %v253 = vpop.f32.mrb[0].mxu0
    %v254 = vadd.f32 0.0, %v253
    %v255 = vpop.f32.mrb[0].mxu0
    %v256 = vpop.f32.mrb[0].mxu0
    %v257 = vadd.f32 0.0, %v256
    %v258 = vpop.f32.mrb[0].mxu0
    %259 = vmatprep.mubr.bf16.mxu0 0
    %260 = vmatmul.mubr.bf16.gmra.mrb[0].mxu0 %v146
    %v261 = vpop.f32.mrb[0].mxu0
    %v262 = vadd.f32 0.0, %v261
    %v263 = vpop.f32.mrb[0].mxu0
    %v264 = vpop.f32.mrb[0].mxu0
    %v265 = vadd.f32 0.0, %v264
    %v266 = vpop.f32.mrb[0].mxu0
    %267 = vmatprep.mubr.bf16.mxu0 0
    %268 = vmatmul.mubr.bf16.gmra.mrb[0].mxu0 %v149
    %v269 = vpop.f32.mrb[0].mxu0
    %v270 = vadd.f32 0.0, %v269
    %v271 = vpop.f32.mrb[0].mxu0
    %v272 = vpop.f32.mrb[0].mxu0
    %v273 = vadd.f32 0.0, %v272
    %v274 = vpop.f32.mrb[0].mxu0
    %275 = vmatprep.mubr.bf16.mxu0 0
    %276 = vmatmul.mubr.bf16.gmra.mrb[0].mxu0 %v152
    %v277 = vpop.f32.mrb[0].mxu0
    %v278 = vadd.f32 0.0, %v277
    %v279 = vpop.f32.mrb[0].mxu0
    %v280 = vpop.f32.mrb[0].mxu0
    %v281 = vadd.f32 0.0, %v280
    %v282 = vpop.f32.mrb[0].mxu0
    %283 = vmatprep.mubr.bf16.mxu0 0
    %284 = vmatmul.mubr.bf16.gmra.mrb[0].mxu0 %v155
    %v285 = vpop.f32.mrb[0].mxu0
    %v286 = vadd.f32 0.0, %v285
    %v287 = vpop.f32.mrb[0].mxu0
    %v288 = vpop.f32.mrb[0].mxu0
    %v289 = vadd.f32 0.0, %v288
    %v290 = vpop.f32.mrb[0].mxu0
    %291 = vmatprep.mubr.bf16.mxu0 0
    %292 = vmatmul.mubr.bf16.gmra.mrb[0].mxu0 %v158
    %v293 = vpop.f32.mrb[0].mxu0
    %v294 = vadd.f32 0.0, %v293
    %v295 = vpop.f32.mrb[0].mxu0
    %v296 = vpop.f32.mrb[0].mxu0
    %v297 = vadd.f32 0.0, %v296
    %v298 = vpop.f32.mrb[0].mxu0
    %299 = vmatprep.mubr.bf16.mxu0 0
    %300 = vmatmul.mubr.bf16.gmra.mrb[0].mxu0 %v161
    %v301 = vpop.f32.mrb[0].mxu0
    %v302 = vadd.f32 0.0, %v301
    %v303 = vpop.f32.mrb[0].mxu0
    %v304 = vpop.f32.mrb[0].mxu0
    %v305 = vadd.f32 0.0, %v304
    %v306 = vpop.f32.mrb[0].mxu0
    %307 = vmatprep.mubr.bf16.mxu0 0
    %308 = vmatmul.mubr.bf16.gmra.mrb[0].mxu0 %v164
    %v309 = vpop.f32.mrb[0].mxu0
    %v310 = vadd.f32 0.0, %v309
    %v311 = vpop.f32.mrb[0].mxu0
    %v312 = vpop.f32.mrb[0].mxu0
    %v313 = vadd.f32 0.0, %v312
    %v314 = vpop.f32.mrb[0].mxu0
    %315 = vmatprep.mubr.bf16.mxu0 0
    %316 = vmatmul.mubr.bf16.gmra.mrb[0].mxu0 %v167
    %v317 = vpop.f32.mrb[0].mxu0
    %v318 = vadd.f32 0.0, %v317
    %v319 = vpop.f32.mrb[0].mxu0
    %v320 = vpop.f32.mrb[0].mxu0
    %v321 = vadd.f32 0.0, %v320
    %v322 = vpop.f32.mrb[0].mxu0
    %323 = vmatprep.mubr.bf16.mxu0 0
    %324 = vmatmul.mubr.bf16.gmra.mrb[0].mxu0 %v170
    %v325 = vpop.f32.mrb[0].mxu0
    %v326 = vadd.f32 0.0, %v325
    %v327 = vpop.f32.mrb[0].mxu0
    %v328 = vpop.f32.mrb[0].mxu0
    %v329 = vadd.f32 0.0, %v328
    %v330 = vpop.f32.mrb[0].mxu0
    %331 = vmatprep.mubr.bf16.mxu0 0
    %332 = vmatmul.mubr.bf16.gmra.mrb[0].mxu0 %v173
    %v333 = vpop.f32.mrb[0].mxu0
    %v334 = vadd.f32 0.0, %v333
    %v335 = vpop.f32.mrb[0].mxu0
    %v336 = vpop.f32.mrb[0].mxu0
    %v337 = vadd.f32 0.0, %v336
    %v338 = vpop.f32.mrb[0].mxu0
    %339 = vdwg.mxu0
    %v340 = vpack.c.bf16 %v217, %v214
    %v341 = vpack.c.bf16 %v225, %v222
    %v342 = vpack.c.bf16 %v233, %v230
    %v343 = vpack.c.bf16 %v241, %v238
    %v344 = vpack.c.bf16 %v249, %v246
    %v345 = vpack.c.bf16 %v257, %v254
    %v346 = vpack.c.bf16 %v265, %v262
    %v347 = vpack.c.bf16 %v273, %v270
    %v348 = vpack.c.bf16 %v281, %v278
    %v349 = vpack.c.bf16 %v289, %v286
    %v350 = vpack.c.bf16 %v297, %v294
    %v351 = vpack.c.bf16 %v305, %v302
    %v352 = vpack.c.bf16 %v313, %v310
    %v353 = vpack.c.bf16 %v321, %v318
    %v354 = vpack.c.bf16 %v329, %v326
    %v355 = vpack.c.bf16 %v337, %v334
    %v372 = vunpack.c.l.b16 %v340
    %v373 = vunpack.c.h.b16 %v340
    %v374 = vunpack.c.l.b16 %v341
    %v375 = vunpack.c.h.b16 %v341
    %v376 = vunpack.c.l.b16 %v342
    %v377 = vunpack.c.h.b16 %v342
    %v378 = vunpack.c.l.b16 %v343
    %v379 = vunpack.c.h.b16 %v343
    %v380 = vunpack.c.l.b16 %v344
    %v381 = vunpack.c.h.b16 %v344
    %v382 = vunpack.c.l.b16 %v345
    %v383 = vunpack.c.h.b16 %v345
    %v384 = vunpack.c.l.b16 %v346
    %v385 = vunpack.c.h.b16 %v346
    %v386 = vunpack.c.l.b16 %v347
    %v387 = vunpack.c.h.b16 %v347
    %v388 = vunpack.c.l.b16 %v348
    %v389 = vunpack.c.h.b16 %v348
    %v390 = vunpack.c.l.b16 %v349
    %v391 = vunpack.c.h.b16 %v349
    %v392 = vunpack.c.l.b16 %v350
    %v393 = vunpack.c.h.b16 %v350
    %v394 = vunpack.c.l.b16 %v351
    %v395 = vunpack.c.h.b16 %v351
    %v396 = vunpack.c.l.b16 %v352
    %v397 = vunpack.c.h.b16 %v352
    %v398 = vunpack.c.l.b16 %v353
    %v399 = vunpack.c.h.b16 %v353
    %v400 = vunpack.c.l.b16 %v354
    %v401 = vunpack.c.h.b16 %v354
    %v402 = vunpack.c.l.b16 %v355
    %v403 = vunpack.c.h.b16 %v355
    %v404 = vpack.c.b16 %v372, %v372
    %v405 = vpack.c.b16 %v373, %v373
    %v406 = vpack.c.b16 %v374, %v374
    %v407 = vpack.c.b16 %v375, %v375
    %v408 = vpack.c.b16 %v376, %v376
    %v409 = vpack.c.b16 %v377, %v377
    %v410 = vpack.c.b16 %v378, %v378
    %v411 = vpack.c.b16 %v379, %v379
    %v412 = vpack.c.b16 %v380, %v380
    %v413 = vpack.c.b16 %v381, %v381
    %v414 = vpack.c.b16 %v382, %v382
    %v415 = vpack.c.b16 %v383, %v383
    %v416 = vpack.c.b16 %v384, %v384
    %v417 = vpack.c.b16 %v385, %v385
    %v418 = vpack.c.b16 %v386, %v386
    %v419 = vpack.c.b16 %v387, %v387
    %v420 = vpack.c.b16 %v388, %v388
    %v421 = vpack.c.b16 %v389, %v389
    %v422 = vpack.c.b16 %v390, %v390
    %v423 = vpack.c.b16 %v391, %v391
    %v424 = vpack.c.b16 %v392, %v392
    %v425 = vpack.c.b16 %v393, %v393
    %v426 = vpack.c.b16 %v394, %v394
    %v427 = vpack.c.b16 %v395, %v395
    %v428 = vpack.c.b16 %v396, %v396
    %v429 = vpack.c.b16 %v397, %v397
    %v430 = vpack.c.b16 %v398, %v398
    %v431 = vpack.c.b16 %v399, %v399
    %v432 = vpack.c.b16 %v400, %v400
    %v433 = vpack.c.b16 %v401, %v401
    %v434 = vpack.c.b16 %v402, %v402
    %v435 = vpack.c.b16 %v403, %v403
    %468 = vst [vmem:[#allocation2] sm:$0xf] %v404
    %469 = vst [vmem:[#allocation2 + $0x4] sm:$0xf] %v405
    %470 = vst [vmem:[#allocation2 + $0x8] sm:$0xf] %v406
    %471 = vst [vmem:[#allocation2 + $0xc] sm:$0xf] %v407
    %472 = vst [vmem:[#allocation2 + $0x10] sm:$0xf] %v408
    %473 = vst [vmem:[#allocation2 + $0x14] sm:$0xf] %v409
    %474 = vst [vmem:[#allocation2 + $0x18] sm:$0xf] %v410
    %475 = vst [vmem:[#allocation2 + $0x1c] sm:$0xf] %v411
    %476 = vst [vmem:[#allocation2 + $0x20] sm:$0xf] %v412
    %477 = vst [vmem:[#allocation2 + $0x24] sm:$0xf] %v413
    %478 = vst [vmem:[#allocation2 + $0x28] sm:$0xf] %v414
    %479 = vst [vmem:[#allocation2 + $0x2c] sm:$0xf] %v415
    %480 = vst [vmem:[#allocation2 + $0x30] sm:$0xf] %v416
    %481 = vst [vmem:[#allocation2 + $0x34] sm:$0xf] %v417
    %482 = vst [vmem:[#allocation2 + $0x38] sm:$0xf] %v418
    %483 = vst [vmem:[#allocation2 + $0x3c] sm:$0xf] %v419
    %484 = vst [vmem:[#allocation2 + $0x40] sm:$0xf] %v420
    %485 = vst [vmem:[#allocation2 + $0x44] sm:$0xf] %v421
    %486 = vst [vmem:[#allocation2 + $0x48] sm:$0xf] %v422
    %487 = vst [vmem:[#allocation2 + $0x4c] sm:$0xf] %v423
    %488 = vst [vmem:[#allocation2 + $0x50] sm:$0xf] %v424
    %489 = vst [vmem:[#allocation2 + $0x54] sm:$0xf] %v425
    %490 = vst [vmem:[#allocation2 + $0x58] sm:$0xf] %v426
    %491 = vst [vmem:[#allocation2 + $0x5c] sm:$0xf] %v427
    %492 = vst [vmem:[#allocation2 + $0x60] sm:$0xf] %v428
    %493 = vst [vmem:[#allocation2 + $0x64] sm:$0xf] %v429
    %494 = vst [vmem:[#allocation2 + $0x68] sm:$0xf] %v430
    %495 = vst [vmem:[#allocation2 + $0x6c] sm:$0xf] %v431
    %496 = vst [vmem:[#allocation2 + $0x70] sm:$0xf] %v432
    %497 = vst [vmem:[#allocation2 + $0x74] sm:$0xf] %v433
    %498 = vst [vmem:[#allocation2 + $0x78] sm:$0xf] %v434
    %499 = vst [vmem:[#allocation2 + $0x7c] sm:$0xf] %v435
    // Predicated region
    $region10: #{tpu_custom_call.1} parent=1 // pred_check
      _
    $region11: #{tpu_custom_call.1} parent=1 // pred_check_branch
      %501 = sbr.rel (0) target = $region13
    $region12: #{tpu_custom_call.1} parent=1 // pred_region
      %s503 = ssub.s32 2048, 2048
      %504 = vsyncadd [#allocation3], %s503
      %s505 = sshll.u32 [#allocation2], 4
      %s506 = int_to_ptr.vmem [resolvable:$true] %s505
      %511 = dma.vmem_to_hbm [thread:$0]  %s506, 2048, %s2, [#allocation3], 64, 64, 4
    $region13: #{tpu_custom_call.1} parent=1 // pred_fallthru
      _
    // Predicated region
    $region14: #{tpu_custom_call.1} parent=1 // pred_check
      _
    $region15: #{tpu_custom_call.1} parent=1 // pred_check_branch
      %513 = sbr.rel (0) target = $region17
    $region16: #{tpu_custom_call.1} parent=1 // pred_region
      %514 = dma.done [#allocation3], 2048
    $region17: #{tpu_custom_call.1} parent=1 // pred_fallthru
      _
    %515 = vsyncpa [#allocation3], 1

</llo_original>
